<compile_context>
chip_gen: v7x
topology: tpu7x:2x2x1
jax: 0.10.0
libtpu: 0.0.40
codegen_flags: <defaults>
</compile_context>

<pallas_src>
import functools
import math

import jax
import jax.numpy as jnp
from jax.experimental import pallas as pl
from jax.experimental.pallas import tpu as pltpu

_MIB = 1 << 20


# ----------------------------- Pallas kernel --------------------------------


def _mlp3_kernel(x_ref, w1_ref, b1_ref, w2_ref, b2_ref, w3_ref, b3_ref, o_ref):
    """Fused 3-layer MLP: relu(x@W1+b1) -> relu(.@W2+b2) -> .@W3+b3."""
    h = jnp.dot(x_ref[...], w1_ref[...], preferred_element_type=jnp.float32)
    h = jnp.maximum(h + b1_ref[...], 0.0)
    h = jnp.dot(h, w2_ref[...], preferred_element_type=jnp.float32)
    h = jnp.maximum(h + b2_ref[...], 0.0)
    o = jnp.dot(h, w3_ref[...], preferred_element_type=jnp.float32)
    o_ref[...] = (o + b3_ref[...]).astype(o_ref.dtype)


# --------------------------- hardware / tiling helpers -----------------------


def _round_up(x, m):
    return (x + m - 1) // m * m


def _tpu_hw_info():
    """Best-effort (vmem_bytes, cores_per_chip, mxu_width) with safe fallbacks."""
    vmem_bytes = 64 * _MIB          # conservative default (v7x-sized VMEM)
    cores_per_chip = 1
    mxu_width = 128
    try:
        kind = jax.devices()[0].device_kind.lower()
    except Exception:
        kind = ""
    if any(t in kind for t in ("v6", "v7", "7x")):
        mxu_width = 256
    if any(t in kind for t in ("v4", "v5p", "v7", "7x")):
        cores_per_chip = 2
    if kind and not any(t in kind for t in ("v7", "7x")):
        vmem_bytes = 128 * _MIB     # v5e / v6e physical VMEM
    try:
        info = pltpu.get_tpu_info()
        vmem_bytes = int(getattr(info, "vmem_capacity_bytes", vmem_bytes))
    except Exception:
        pass
    return vmem_bytes, cores_per_chip, mxu_width


def _align_feature(d, mxu_width):
    # Lane dims must be 128-aligned; prefer full-MXU (256) alignment on
    # 256-wide-MXU generations once the dim exceeds one lane group.
    return _round_up(d, 128 if d <= 128 else mxu_width)


def _pick_row_tile(m, *, k, hp, np_, weight_bytes, vmem_budget, cores_per_chip):
    # f32 bytes of per-row VMEM: double-buffered x & out tiles plus the two
    # (TM, Hp) intermediates that live in internal scratch.
    per_row_bytes = 4 * (2 * k + 2 * np_ + 3 * hp)
    avail = max(vmem_budget - weight_bytes, per_row_bytes * 8)
    tm = max((avail // per_row_bytes) // 8 * 8, 8)
    tm = min(tm, 512)                              # ~85% of roofline at 512 rows
    if cores_per_chip > 1 and m >= 2 * cores_per_chip * 64:
        # >= 2 grid steps per TensorCore so the x-tile DMA overlaps (megacore).
        steps = 2 * cores_per_chip
        tm = min(tm, max(_round_up(-(-m // steps), 8), 64))
    tm = min(tm, _round_up(m, 8))                  # never exceed the batch
    if tm >= 256:
        tm = tm // 256 * 256                       # 256-aligned LHS feeds the MXU fully
    return max(tm, 8)


# --------------------------- parameter preparation ---------------------------


def prepare_params(params, hw=None):
    """Pad weights ONCE into the kernel layout (weights pre-transposed [in, out])."""
    if hw is None:
        hw = _tpu_hw_info()
    _, _, mxu_width = hw
    K, H = params["w1"].shape
    N = params["w3"].shape[1]
    Hp = _align_feature(H, mxu_width)
    Np = _align_feature(N, mxu_width)
    return {
        "w1": jnp.pad(params["w1"], ((0, 0), (0, Hp - H))),
        "b1": jnp.pad(params["b1"], (0, Hp - H)).reshape(1, Hp),
        "w2": jnp.pad(params["w2"], ((0, Hp - H), (0, Hp - H))),
        "b2": jnp.pad(params["b2"], (0, Hp - H)).reshape(1, Hp),
        "w3": jnp.pad(params["w3"], ((0, Hp - H), (0, Np - N))),
        "b3": jnp.pad(params["b3"], (0, Np - N)).reshape(1, Np),
        "num_in": K,
        "num_out": N,
        "hw": hw,
    }


# ----------------------------- forward wrapper --------------------------------


def two_layer_fc_forward(prep, x, *, single_buffer_weights=True):
    """x: [M, num_in] float32. Returns [M, num_out] float32."""
    M, K = x.shape
    assert K == prep["num_in"], (K, prep["num_in"])
    N = prep["num_out"]
    Hp = prep["w1"].shape[1]
    Np = prep["w3"].shape[1]
    vmem_bytes, cores_per_chip, _ = prep["hw"]

    bufw = 1 if single_buffer_weights else 2
    weight_bytes = 4 * bufw * (K * Hp + Hp * Hp + Hp * Np + 2 * Hp + Np)
    vmem_budget = int(0.8 * vmem_bytes)
    # TODO(synk): hidden-dim-tiled (accumulator) fallback when resident weights
    # exceed vmem_budget; the resident-weight design is assumed here.

    TM = _pick_row_tile(M, k=K, hp=Hp, np_=Np, weight_bytes=weight_bytes,
                        vmem_budget=vmem_budget, cores_per_chip=cores_per_chip)
    M_pad = _round_up(M, TM)
    x_p = x if M_pad == M else jnp.pad(x, ((0, M_pad - M), (0, 0)))

    per_row_bytes = 4 * (2 * K + 2 * Np + 3 * Hp)
    footprint = weight_bytes + TM * per_row_bytes
    vmem_limit = min(int(0.9 * vmem_bytes), max(footprint + 16 * _MIB, 32 * _MIB))

    wkw = {"pipeline_mode": pl.Buffered(1)} if single_buffer_weights else {}
    cost = pl.CostEstimate(
        flops=2 * M_pad * (K * Hp + Hp * Hp + Hp * Np),
        transcendentals=0,
        bytes_accessed=4 * (M_pad * K + M_pad * Np
                            + K * Hp + Hp * Hp + Hp * Np + 2 * Hp + Np),
    )

    out = pl.pallas_call(
        _mlp3_kernel,
        out_shape=jax.ShapeDtypeStruct((M_pad, Np), jnp.float32),
        grid=(M_pad // TM,),
        in_specs=[
            pl.BlockSpec((TM, K), lambda i: (i, 0)),            # x row tile
            pl.BlockSpec((K, Hp), lambda i: (0, 0), **wkw),     # W1 (resident)
            pl.BlockSpec((1, Hp), lambda i: (0, 0), **wkw),     # b1
            pl.BlockSpec((Hp, Hp), lambda i: (0, 0), **wkw),    # W2
            pl.BlockSpec((1, Hp), lambda i: (0, 0), **wkw),     # b2
            pl.BlockSpec((Hp, Np), lambda i: (0, 0), **wkw),    # W3
            pl.BlockSpec((1, Np), lambda i: (0, 0), **wkw),     # b3
        ],
        out_specs=pl.BlockSpec((TM, Np), lambda i: (i, 0)),
        compiler_params=pltpu.CompilerParams(
            dimension_semantics=("parallel",),
            vmem_limit_bytes=vmem_limit),
        cost_estimate=cost,
    )(x_p, prep["w1"], prep["b1"], prep["w2"], prep["b2"], prep["w3"], prep["b3"])

    return out[:M, :N]


# --------------------------- parameter construction --------------------------


def _init_linear(key, fan_in, fan_out):
    """nn.Linear default init; weight stored pre-transposed as [in, out]."""
    kw, kb = jax.random.split(key)
    bound = 1.0 / math.sqrt(fan_in)
    w = jax.random.uniform(kw, (fan_in, fan_out), jnp.float32, -bound, bound)
    b = jax.random.uniform(kb, (fan_out,), jnp.float32, -bound, bound)
    return w, b


def make_params(key, num_in, num_out, hidden_dim):
    k1, k2, k3 = jax.random.split(key, 3)
    w1, b1 = _init_linear(k1, num_in, hidden_dim)
    w2, b2 = _init_linear(k2, hidden_dim, hidden_dim)
    w3, b3 = _init_linear(k3, hidden_dim, num_out)
    return {"w1": w1, "b1": b1, "w2": w2, "b2": b2, "w3": w3, "b3": b3}


# ------------------------------- reference -----------------------------------


def ref_forward(params, x):
    h = jax.nn.relu(x @ params["w1"] + params["b1"])
    h = jax.nn.relu(h @ params["w2"] + params["b2"])
    return h @ params["w3"] + params["b3"]


# ----------------------------------- main -------------------------------------


if __name__ == "__main__":
    # TODO(synk): `activation` and `out_fn` are arbitrary user callables in the
    # PyTorch module; the defaults (ReLU, identity) are what is fused here.
    num_in, hidden_dim, num_out = 16, 32, 8
    batch = 16

    key = jax.random.PRNGKey(0)
    kp, kx = jax.random.split(key)
    params = make_params(kp, num_in, num_out, hidden_dim)
    x = jax.random.normal(kx, (batch, num_in), jnp.float32)

    prep = prepare_params(params)

    def build(single_buffer):
        return jax.jit(functools.partial(
            two_layer_fc_forward, prep, single_buffer_weights=single_buffer))

    try:
        out = jax.block_until_ready(build(True)(x))
    except Exception:
        # pl.Buffered(1) unsupported on this jax version: fall back to the
        # default double-buffered weight specs (correctness identical).
        out = jax.block_until_ready(build(False)(x))

    assert out.shape == (batch, num_out), out.shape
    assert bool(jnp.all(jnp.isfinite(out)))
    ref = ref_forward(params, x)
    assert jnp.allclose(out, ref, atol=1e-4, rtol=1e-4), (
        float(jnp.max(jnp.abs(out - ref))))
    print("KERNEL_OK")
</pallas_src>

<mosaic_0001>
module attributes {stable_mosaic.version = 11 : i64} {
  func.func @_mlp3_kernel(%arg0: i32, %arg1: memref<16x16xf32, #tpu.memory_space<vmem>>, %arg2: memref<16x128xf32, #tpu.memory_space<vmem>>, %arg3: memref<1x128xf32, #tpu.memory_space<vmem>>, %arg4: memref<128x128xf32, #tpu.memory_space<vmem>>, %arg5: memref<1x128xf32, #tpu.memory_space<vmem>>, %arg6: memref<128x128xf32, #tpu.memory_space<vmem>>, %arg7: memref<1x128xf32, #tpu.memory_space<vmem>>, %arg8: memref<16x128xf32, #tpu.memory_space<vmem>>) attributes {dimension_semantics = [#tpu.dimension_semantics<parallel>], iteration_bounds = array<i64: 1>, scalar_prefetch = 0 : i64, scratch_operands = 0 : i64, tpu.core_type = #tpu.core_type<tc>, window_params = [{transform_indices = @transform_0, window_bounds = array<i64: 16, 16>}, {pipeline_mode = #tpu.pipeline_mode<synchronous>, transform_indices = @transform_1, window_bounds = array<i64: 16, 128>}, {pipeline_mode = #tpu.pipeline_mode<synchronous>, transform_indices = @transform_2, window_bounds = array<i64: 1, 128>}, {pipeline_mode = #tpu.pipeline_mode<synchronous>, transform_indices = @transform_3, window_bounds = array<i64: 128, 128>}, {pipeline_mode = #tpu.pipeline_mode<synchronous>, transform_indices = @transform_4, window_bounds = array<i64: 1, 128>}, {pipeline_mode = #tpu.pipeline_mode<synchronous>, transform_indices = @transform_5, window_bounds = array<i64: 128, 128>}, {pipeline_mode = #tpu.pipeline_mode<synchronous>, transform_indices = @transform_6, window_bounds = array<i64: 1, 128>}, {transform_indices = @transform_7, window_bounds = array<i64: 16, 128>}]} {
    %c0 = arith.constant 0 : index
    %c0_0 = arith.constant 0 : index
    %0 = vector.load %arg1[%c0, %c0_0] : memref<16x16xf32, #tpu.memory_space<vmem>>, vector<16x16xf32>
    %c0_1 = arith.constant 0 : index
    %c0_2 = arith.constant 0 : index
    %1 = vector.load %arg2[%c0_1, %c0_2] : memref<16x128xf32, #tpu.memory_space<vmem>>, vector<16x128xf32>
    %cst = arith.constant dense<0.000000e+00> : vector<16x128xf32>
    %2 = tpu.matmul %0, %1, %cst {dimension_numbers = #tpu.dot_dimension_numbers<[1], [0], [0], [1], [0, 0, 1, 1], [], []>} : vector<16x16xf32>, vector<16x128xf32>, vector<16x128xf32> -> vector<16x128xf32>
    %c0_3 = arith.constant 0 : index
    %c0_4 = arith.constant 0 : index
    %3 = vector.load %arg3[%c0_3, %c0_4] : memref<1x128xf32, #tpu.memory_space<vmem>>, vector<1x128xf32>
    %4 = vector.broadcast %3 : vector<1x128xf32> to vector<16x128xf32>
    %5 = arith.addf %2, %4 : vector<16x128xf32>
    %cst_5 = arith.constant 0.000000e+00 : f32
    %6 = vector.broadcast %cst_5 : f32 to vector<16x128xf32>
    %7 = arith.maximumf %5, %6 : vector<16x128xf32>
    %c0_6 = arith.constant 0 : index
    %c0_7 = arith.constant 0 : index
    %8 = vector.load %arg4[%c0_6, %c0_7] : memref<128x128xf32, #tpu.memory_space<vmem>>, vector<128x128xf32>
    %cst_8 = arith.constant dense<0.000000e+00> : vector<16x128xf32>
    %9 = tpu.matmul %7, %8, %cst_8 {dimension_numbers = #tpu.dot_dimension_numbers<[1], [0], [0], [1], [0, 0, 1, 1], [], []>} : vector<16x128xf32>, vector<128x128xf32>, vector<16x128xf32> -> vector<16x128xf32>
    %c0_9 = arith.constant 0 : index
    %c0_10 = arith.constant 0 : index
    %10 = vector.load %arg5[%c0_9, %c0_10] : memref<1x128xf32, #tpu.memory_space<vmem>>, vector<1x128xf32>
    %11 = vector.broadcast %10 : vector<1x128xf32> to vector<16x128xf32>
    %12 = arith.addf %9, %11 : vector<16x128xf32>
    %cst_11 = arith.constant 0.000000e+00 : f32
    %13 = vector.broadcast %cst_11 : f32 to vector<16x128xf32>
    %14 = arith.maximumf %12, %13 : vector<16x128xf32>
    %c0_12 = arith.constant 0 : index
    %c0_13 = arith.constant 0 : index
    %15 = vector.load %arg6[%c0_12, %c0_13] : memref<128x128xf32, #tpu.memory_space<vmem>>, vector<128x128xf32>
    %cst_14 = arith.constant dense<0.000000e+00> : vector<16x128xf32>
    %16 = tpu.matmul %14, %15, %cst_14 {dimension_numbers = #tpu.dot_dimension_numbers<[1], [0], [0], [1], [0, 0, 1, 1], [], []>} : vector<16x128xf32>, vector<128x128xf32>, vector<16x128xf32> -> vector<16x128xf32>
    %c0_15 = arith.constant 0 : index
    %c0_16 = arith.constant 0 : index
    %17 = vector.load %arg7[%c0_15, %c0_16] : memref<1x128xf32, #tpu.memory_space<vmem>>, vector<1x128xf32>
    %18 = vector.broadcast %17 : vector<1x128xf32> to vector<16x128xf32>
    %19 = arith.addf %16, %18 : vector<16x128xf32>
    %c0_17 = arith.constant 0 : index
    %c0_18 = arith.constant 0 : index
    %20 = vector.load %arg8[%c0_17, %c0_18] : memref<16x128xf32, #tpu.memory_space<vmem>>, vector<16x128xf32>
    tpu.vector_store %arg8[%c0_17, %c0_18], %19 {strides = array<i32>} : memref<16x128xf32, #tpu.memory_space<vmem>>, vector<16x128xf32>,
    return
  }
  func.func @transform_0(%arg0: i32) -> (i32, i32) {
    %c0_i32 = arith.constant 0 : i32
    %c0_i32_0 = arith.constant 0 : i32
    return %arg0, %c0_i32 : i32, i32
  }
  func.func @transform_1(%arg0: i32) -> (i32, i32) {
    %c0_i32 = arith.constant 0 : i32
    %c0_i32_0 = arith.constant 0 : i32
    %c0_i32_1 = arith.constant 0 : i32
    return %c0_i32, %c0_i32_0 : i32, i32
  }
  func.func @transform_2(%arg0: i32) -> (i32, i32) {
    %c0_i32 = arith.constant 0 : i32
    %c0_i32_0 = arith.constant 0 : i32
    %c0_i32_1 = arith.constant 0 : i32
    return %c0_i32, %c0_i32_0 : i32, i32
  }
  func.func @transform_3(%arg0: i32) -> (i32, i32) {
    %c0_i32 = arith.constant 0 : i32
    %c0_i32_0 = arith.constant 0 : i32
    %c0_i32_1 = arith.constant 0 : i32
    return %c0_i32, %c0_i32_0 : i32, i32
  }
  func.func @transform_4(%arg0: i32) -> (i32, i32) {
    %c0_i32 = arith.constant 0 : i32
    %c0_i32_0 = arith.constant 0 : i32
    %c0_i32_1 = arith.constant 0 : i32
    return %c0_i32, %c0_i32_0 : i32, i32
  }
  func.func @transform_5(%arg0: i32) -> (i32, i32) {
    %c0_i32 = arith.constant 0 : i32
    %c0_i32_0 = arith.constant 0 : i32
    %c0_i32_1 = arith.constant 0 : i32
    return %c0_i32, %c0_i32_0 : i32, i32
  }
  func.func @transform_6(%arg0: i32) -> (i32, i32) {
    %c0_i32 = arith.constant 0 : i32
    %c0_i32_0 = arith.constant 0 : i32
    %c0_i32_1 = arith.constant 0 : i32
    return %c0_i32, %c0_i32_0 : i32, i32
  }
  func.func @transform_7(%arg0: i32) -> (i32, i32) {
    %c0_i32 = arith.constant 0 : i32
    %c0_i32_0 = arith.constant 0 : i32
    return %arg0, %c0_i32 : i32, i32
  }
}

module attributes {stable_mosaic.version = 11 : i64} {
  func.func @_mlp3_kernel(%arg0: i32, %arg1: memref<16x16xf32, #tpu.memory_space<vmem>>, %arg2: memref<16x128xf32, #tpu.memory_space<vmem>>, %arg3: memref<1x128xf32, #tpu.memory_space<vmem>>, %arg4: memref<128x128xf32, #tpu.memory_space<vmem>>, %arg5: memref<1x128xf32, #tpu.memory_space<vmem>>, %arg6: memref<128x128xf32, #tpu.memory_space<vmem>>, %arg7: memref<1x128xf32, #tpu.memory_space<vmem>>, %arg8: memref<16x128xf32, #tpu.memory_space<vmem>>) attributes {dimension_semantics = [#tpu.dimension_semantics<parallel>], iteration_bounds = array<i64: 1>, scalar_prefetch = 0 : i64, scratch_operands = 0 : i64, tpu.core_type = #tpu.core_type<tc>, window_params = [{transform_indices = @transform_0, window_bounds = array<i64: 16, 16>}, {pipeline_mode = #tpu.pipeline_mode<synchronous>, transform_indices = @transform_1, window_bounds = array<i64: 16, 128>}, {pipeline_mode = #tpu.pipeline_mode<synchronous>, transform_indices = @transform_2, window_bounds = array<i64: 1, 128>}, {pipeline_mode = #tpu.pipeline_mode<synchronous>, transform_indices = @transform_3, window_bounds = array<i64: 128, 128>}, {pipeline_mode = #tpu.pipeline_mode<synchronous>, transform_indices = @transform_4, window_bounds = array<i64: 1, 128>}, {pipeline_mode = #tpu.pipeline_mode<synchronous>, transform_indices = @transform_5, window_bounds = array<i64: 128, 128>}, {pipeline_mode = #tpu.pipeline_mode<synchronous>, transform_indices = @transform_6, window_bounds = array<i64: 1, 128>}, {transform_indices = @transform_7, window_bounds = array<i64: 16, 128>}]} {
    %c0 = arith.constant 0 : index
    %c0_0 = arith.constant 0 : index
    %0 = vector.load %arg1[%c0, %c0_0] : memref<16x16xf32, #tpu.memory_space<vmem>>, vector<16x16xf32>
    %c0_1 = arith.constant 0 : index
    %c0_2 = arith.constant 0 : index
    %1 = vector.load %arg2[%c0_1, %c0_2] : memref<16x128xf32, #tpu.memory_space<vmem>>, vector<16x128xf32>
    %cst = arith.constant dense<0.000000e+00> : vector<16x128xf32>
    %2 = tpu.matmul %0, %1, %cst {dimension_numbers = #tpu.dot_dimension_numbers<[1], [0], [0], [1], [0, 0, 1, 1], [], []>} : vector<16x16xf32>, vector<16x128xf32>, vector<16x128xf32> -> vector<16x128xf32>
    %c0_3 = arith.constant 0 : index
    %c0_4 = arith.constant 0 : index
    %3 = vector.load %arg3[%c0_3, %c0_4] : memref<1x128xf32, #tpu.memory_space<vmem>>, vector<1x128xf32>
    %4 = vector.broadcast %3 : vector<1x128xf32> to vector<16x128xf32>
    %5 = arith.addf %2, %4 : vector<16x128xf32>
    %cst_5 = arith.constant 0.000000e+00 : f32
    %6 = vector.broadcast %cst_5 : f32 to vector<16x128xf32>
    %7 = arith.maximumf %5, %6 : vector<16x128xf32>
    %c0_6 = arith.constant 0 : index
    %c0_7 = arith.constant 0 : index
    %8 = vector.load %arg4[%c0_6, %c0_7] : memref<128x128xf32, #tpu.memory_space<vmem>>, vector<128x128xf32>
    %cst_8 = arith.constant dense<0.000000e+00> : vector<16x128xf32>
    %9 = tpu.matmul %7, %8, %cst_8 {dimension_numbers = #tpu.dot_dimension_numbers<[1], [0], [0], [1], [0, 0, 1, 1], [], []>} : vector<16x128xf32>, vector<128x128xf32>, vector<16x128xf32> -> vector<16x128xf32>
    %c0_9 = arith.constant 0 : index
    %c0_10 = arith.constant 0 : index
    %10 = vector.load %arg5[%c0_9, %c0_10] : memref<1x128xf32, #tpu.memory_space<vmem>>, vector<1x128xf32>
    %11 = vector.broadcast %10 : vector<1x128xf32> to vector<16x128xf32>
    %12 = arith.addf %9, %11 : vector<16x128xf32>
    %cst_11 = arith.constant 0.000000e+00 : f32
    %13 = vector.broadcast %cst_11 : f32 to vector<16x128xf32>
    %14 = arith.maximumf %12, %13 : vector<16x128xf32>
    %c0_12 = arith.constant 0 : index
    %c0_13 = arith.constant 0 : index
    %15 = vector.load %arg6[%c0_12, %c0_13] : memref<128x128xf32, #tpu.memory_space<vmem>>, vector<128x128xf32>
    %cst_14 = arith.constant dense<0.000000e+00> : vector<16x128xf32>
    %16 = tpu.matmul %14, %15, %cst_14 {dimension_numbers = #tpu.dot_dimension_numbers<[1], [0], [0], [1], [0, 0, 1, 1], [], []>} : vector<16x128xf32>, vector<128x128xf32>, vector<16x128xf32> -> vector<16x128xf32>
    %c0_15 = arith.constant 0 : index
    %c0_16 = arith.constant 0 : index
    %17 = vector.load %arg7[%c0_15, %c0_16] : memref<1x128xf32, #tpu.memory_space<vmem>>, vector<1x128xf32>
    %18 = vector.broadcast %17 : vector<1x128xf32> to vector<16x128xf32>
    %19 = arith.addf %16, %18 : vector<16x128xf32>
    %c0_17 = arith.constant 0 : index
    %c0_18 = arith.constant 0 : index
    %20 = vector.load %arg8[%c0_17, %c0_18] : memref<16x128xf32, #tpu.memory_space<vmem>>, vector<16x128xf32>
    tpu.vector_store %arg8[%c0_17, %c0_18], %19 {strides = array<i32>} : memref<16x128xf32, #tpu.memory_space<vmem>>, vector<16x128xf32>,
    return
  }
  func.func @transform_0(%arg0: i32) -> (i32, i32) {
    %c0_i32 = arith.constant 0 : i32
    %c0_i32_0 = arith.constant 0 : i32
    return %arg0, %c0_i32 : i32, i32
  }
  func.func @transform_1(%arg0: i32) -> (i32, i32) {
    %c0_i32 = arith.constant 0 : i32
    %c0_i32_0 = arith.constant 0 : i32
    %c0_i32_1 = arith.constant 0 : i32
    return %c0_i32, %c0_i32_0 : i32, i32
  }
  func.func @transform_2(%arg0: i32) -> (i32, i32) {
    %c0_i32 = arith.constant 0 : i32
    %c0_i32_0 = arith.constant 0 : i32
    %c0_i32_1 = arith.constant 0 : i32
    return %c0_i32, %c0_i32_0 : i32, i32
  }
  func.func @transform_3(%arg0: i32) -> (i32, i32) {
    %c0_i32 = arith.constant 0 : i32
    %c0_i32_0 = arith.constant 0 : i32
    %c0_i32_1 = arith.constant 0 : i32
    return %c0_i32, %c0_i32_0 : i32, i32
  }
  func.func @transform_4(%arg0: i32) -> (i32, i32) {
    %c0_i32 = arith.constant 0 : i32
    %c0_i32_0 = arith.constant 0 : i32
    %c0_i32_1 = arith.constant 0 : i32
    return %c0_i32, %c0_i32_0 : i32, i32
  }
  func.func @transform_5(%arg0: i32) -> (i32, i32) {
    %c0_i32 = arith.constant 0 : i32
    %c0_i32_0 = arith.constant 0 : i32
    %c0_i32_1 = arith.constant 0 : i32
    return %c0_i32, %c0_i32_0 : i32, i32
  }
  func.func @transform_6(%arg0: i32) -> (i32, i32) {
    %c0_i32 = arith.constant 0 : i32
    %c0_i32_0 = arith.constant 0 : i32
    %c0_i32_1 = arith.constant 0 : i32
    return %c0_i32, %c0_i32_0 : i32, i32
  }
  func.func @transform_7(%arg0: i32) -> (i32, i32) {
    %c0_i32 = arith.constant 0 : i32
    %c0_i32_0 = arith.constant 0 : i32
    return %arg0, %c0_i32 : i32, i32
  }
}

</mosaic_0001>

<llo_original>
// kernel: two_layer_fc_forward.1
$region0: #{two_layer_fc_forward.1}
  #allocation0 [shape = 'u32[]', space=smem, size = 0x4, offset = 0x4, fixed_abs, tag = 'smem constant byte address 0x4 - core index']
  #allocation1 [shape = 'u32[144,128]{1,0:T(1,128)}', space=vmem, size = 0x12000, scoped, tag = 'internal scratch']
  %s0 = inlined_call_operand.hbm [shape: f32[16,16], index: 0, kind: input, shape index: {}]
  %s1 = inlined_call_operand.hbm [shape: f32[16,128], index: 1, kind: input, shape index: {}]
  %s2 = inlined_call_operand.vmem [shape: f32[1,128], index: 2, kind: input, shape index: {}]
  %s3 = inlined_call_operand.hbm [shape: f32[128,128], index: 3, kind: input, shape index: {}]
  %s4 = inlined_call_operand.vmem [shape: f32[1,128], index: 4, kind: input, shape index: {}]
  %s5 = inlined_call_operand.hbm [shape: f32[128,128], index: 5, kind: input, shape index: {}]
  %s6 = inlined_call_operand.vmem [shape: f32[1,128], index: 6, kind: input, shape index: {}]
  %s7 = inlined_call_operand.vmem [shape: f32[16,128], index: 7, kind: output, shape index: {}]
  %s8 = sld [smem:[#allocation0]]
  $region54: #{two_layer_fc_forward.1} parent=0
    _
  %s10 = ssub.s32 1, %s8
  %s11 = scalar_select 0, %s10, %s8
  $region1: #{two_layer_fc_forward.1} parent=0
    #allocation2 [shape = 'u8[8192]{0}', space=vmem, size = 0x2000, scoped, tag = 'input window, operand 0, single buffered']
    #allocation3 [shape = 's32[1]{0}', space=sflag, size = 0x4, scoped, tag = 'scoped memory for two_layer_fc_forward.1']
    #allocation4 [shape = 'u8[8192]{0}', space=vmem, size = 0x2000, scoped, tag = 'input window, operand 1, single buffered']
    #allocation5 [shape = 's32[1]{0}', space=sflag, size = 0x4, scoped, tag = 'scoped memory for two_layer_fc_forward.1']
    #allocation6 [shape = 'u8[65536]{0}', space=vmem, size = 0x10000, scoped, tag = 'input window, operand 3, single buffered']
    #allocation7 [shape = 'u8[65536]{0}', space=vmem, size = 0x10000, scoped, tag = 'input window, operand 5, single buffered']
    #allocation8 [shape = 's32[1]{0}', space=sflag, size = 0x4, scoped, tag = 'scoped memory for two_layer_fc_forward.1']
    %12 = vsyncpa [#allocation3], 0
    %13 = vsyncpa [#allocation5], 0
    %14 = vsyncpa [#allocation8], 0
    // Predicated region
    $region2: #{two_layer_fc_forward.1} parent=1 // pred_check
      _
    $region3: #{two_layer_fc_forward.1} parent=1 // pred_check_branch
      %16 = sbr.rel (0) target = $region5
    $region4: #{two_layer_fc_forward.1} parent=1 // pred_region
      %s18 = ssub.s32 256, 256
      %19 = vsyncadd [#allocation3], %s18
      %s20 = sshll.u32 [#allocation2], 4
      %s21 = int_to_ptr.vmem [resolvable:$true] %s20
      %26 = dma.hbm_to_vmem [thread:$0]  %s0, 256, %s21, [#allocation3], 128, 128, 8
    $region5: #{two_layer_fc_forward.1} parent=1 // pred_fallthru
      _
    // Predicated region
    $region6: #{two_layer_fc_forward.1} parent=1 // pred_check
      _
    $region7: #{two_layer_fc_forward.1} parent=1 // pred_check_branch
      %28 = sbr.rel (0) target = $region9
    $region8: #{two_layer_fc_forward.1} parent=1 // pred_region
      %s30 = ssub.s32 256, 256
      %31 = vsyncadd [#allocation5], %s30
      %s32 = sshll.u32 [#allocation4], 4
      %s33 = int_to_ptr.vmem [resolvable:$true] %s32
      %38 = dma.hbm_to_vmem [thread:$0]  %s1, 256, %s33, [#allocation5], 128, 128, 8
    $region9: #{two_layer_fc_forward.1} parent=1 // pred_fallthru
      _
    // Predicated region
    $region10: #{two_layer_fc_forward.1} parent=1 // pred_check
      _
    $region11: #{two_layer_fc_forward.1} parent=1 // pred_check_branch
      %40 = sbr.rel (0) target = $region13
    $region12: #{two_layer_fc_forward.1} parent=1 // pred_region
      _
    $region13: #{two_layer_fc_forward.1} parent=1 // pred_fallthru
      _
    // Predicated region
    $region14: #{two_layer_fc_forward.1} parent=1 // pred_check
      _
    $region15: #{two_layer_fc_forward.1} parent=1 // pred_check_branch
      %42 = sbr.rel (0) target = $region17
    $region16: #{two_layer_fc_forward.1} parent=1 // pred_region
      %s44 = ssub.s32 2048, 2048
      %45 = vsyncadd [#allocation5], %s44
      %s46 = sshll.u32 [#allocation6], 4
      %s47 = int_to_ptr.vmem [resolvable:$true] %s46
      %52 = dma.hbm_to_vmem [thread:$0]  %s3, 2048, %s47, [#allocation5], 128, 128, 8
    $region17: #{two_layer_fc_forward.1} parent=1 // pred_fallthru
      _
    // Predicated region
    $region18: #{two_layer_fc_forward.1} parent=1 // pred_check
      _
    $region19: #{two_layer_fc_forward.1} parent=1 // pred_check_branch
      %54 = sbr.rel (0) target = $region21
    $region20: #{two_layer_fc_forward.1} parent=1 // pred_region
      _
    $region21: #{two_layer_fc_forward.1} parent=1 // pred_fallthru
      _
    // Predicated region
    $region22: #{two_layer_fc_forward.1} parent=1 // pred_check
      _
    $region23: #{two_layer_fc_forward.1} parent=1 // pred_check_branch
      %56 = sbr.rel (0) target = $region25
    $region24: #{two_layer_fc_forward.1} parent=1 // pred_region
      %s58 = ssub.s32 2048, 2048
      %59 = vsyncadd [#allocation8], %s58
      %s60 = sshll.u32 [#allocation7], 4
      %s61 = int_to_ptr.vmem [resolvable:$true] %s60
      %66 = dma.hbm_to_vmem [thread:$0]  %s5, 2048, %s61, [#allocation8], 128, 128, 8
    $region25: #{two_layer_fc_forward.1} parent=1 // pred_fallthru
      _
    // Predicated region
    $region26: #{two_layer_fc_forward.1} parent=1 // pred_check
      _
    $region27: #{two_layer_fc_forward.1} parent=1 // pred_check_branch
      %68 = sbr.rel (0) target = $region29
    $region28: #{two_layer_fc_forward.1} parent=1 // pred_region
      _
    $region29: #{two_layer_fc_forward.1} parent=1 // pred_fallthru
      _
    // Predicated region
    $region30: #{two_layer_fc_forward.1} parent=1 // pred_check
      _
    $region31: #{two_layer_fc_forward.1} parent=1 // pred_check_branch
      %70 = sbr.rel (0) target = $region33
    $region32: #{two_layer_fc_forward.1} parent=1 // pred_region
      %71 = dma.done [#allocation3], 256
    $region33: #{two_layer_fc_forward.1} parent=1 // pred_fallthru
      _
    // Predicated region
    $region34: #{two_layer_fc_forward.1} parent=1 // pred_check
      _
    $region35: #{two_layer_fc_forward.1} parent=1 // pred_check_branch
      %73 = sbr.rel (0) target = $region37
    $region36: #{two_layer_fc_forward.1} parent=1 // pred_region
      %74 = dma.done [#allocation5], 256
    $region37: #{two_layer_fc_forward.1} parent=1 // pred_fallthru
      _
    // Predicated region
    $region38: #{two_layer_fc_forward.1} parent=1 // pred_check
      _
    $region39: #{two_layer_fc_forward.1} parent=1 // pred_check_branch
      %76 = sbr.rel (0) target = $region41
    $region40: #{two_layer_fc_forward.1} parent=1 // pred_region
      %77 = dma.done [#allocation5], 2048
    $region41: #{two_layer_fc_forward.1} parent=1 // pred_fallthru
      _
    // Predicated region
    $region42: #{two_layer_fc_forward.1} parent=1 // pred_check
      _
    $region43: #{two_layer_fc_forward.1} parent=1 // pred_check_branch
      %79 = sbr.rel (0) target = $region45
    $region44: #{two_layer_fc_forward.1} parent=1 // pred_region
      %80 = dma.done [#allocation8], 2048
    $region45: #{two_layer_fc_forward.1} parent=1 // pred_fallthru
      _
    %v81 = vld [vmem:[#allocation2] sm:$0xff]
    %v82 = vld [vmem:[#allocation2 + $0x8] sm:$0xff]
    %v83 = vld [vmem:[#allocation4] sm:$0xff]
    %v84 = vld [vmem:[#allocation4 + $0x8] sm:$0xff]
    %v85 = vld [vmem:[%s2] sm:$0x1]
    %v87 = vlaneseq
    %v88 = vshrl.u32 %v87, 7
    %v89 = vsub.s32 0, %v88
    %v90 = vrot.slane %v85, %v89
    %vm92 = vcmask 130048
    %v94 = vsel %vm92, %v81, 0
    %v97 = vsel %vm92, %v82, 0
    %99 = vmatprep.subr.mxu0 0.0
    %100 = vmatpush1.msra.mxu0 %v83
    %101 = vmatprep.subr.mxu0 0.0
    %102 = vmatpush1.msra.mxu0 %v84
    %103 = vmatprep.subr.mxu0 0.0
    %104 = vmatpush1.msra.mxu0 0.0
    %105 = vmatprep.subr.mxu0 0.0
    %106 = vmatpush1.msra.mxu0 0.0
    %107 = vmatprep.subr.mxu0 0.0
    %108 = vmatpush1.msra.mxu0 0.0
    %109 = vmatprep.subr.mxu0 0.0
    %110 = vmatpush1.msra.mxu0 0.0
    %111 = vmatprep.subr.mxu0 0.0
    %112 = vmatpush1.msra.mxu0 0.0
    %113 = vmatprep.subr.mxu0 0.0
    %114 = vmatpush1.msra.mxu0 0.0
    %115 = vmatprep.subr.mxu0 0.0
    %116 = vmatpush1.msra.mxu0 0.0
    %117 = vmatprep.subr.mxu0 0.0
    %118 = vmatpush1.msra.mxu0 0.0
    %119 = vmatprep.subr.mxu0 0.0
    %120 = vmatpush1.msra.mxu0 0.0
    %121 = vmatprep.subr.mxu0 0.0
    %122 = vmatpush1.msra.mxu0 0.0
    %123 = vmatprep.subr.mxu0 0.0
    %124 = vmatpush1.msra.mxu0 0.0
    %125 = vmatprep.subr.mxu0 0.0
    %126 = vmatpush1.msra.mxu0 0.0
    %127 = vmatprep.subr.mxu0 0.0
    %128 = vmatpush1.msra.mxu0 0.0
    %129 = vmatprep.subr.mxu0 0.0
    %130 = vmatpush1.msra.mxu0 0.0
    %131 = vmatprep.subr.mxu0 0.0
    %132 = vmatpush1.msra.mxu0 0.0
    %133 = vmatprep.subr.mxu0 0.0
    %134 = vmatpush1.msra.mxu0 0.0
    %135 = vmatprep.subr.mxu0 0.0
    %136 = vmatpush1.msra.mxu0 0.0
    %137 = vmatprep.subr.mxu0 0.0
    %138 = vmatpush1.msra.mxu0 0.0
    %139 = vmatprep.subr.mxu0 0.0
    %140 = vmatpush1.msra.mxu0 0.0
    %141 = vmatprep.subr.mxu0 0.0
    %142 = vmatpush1.msra.mxu0 0.0
    %143 = vmatprep.subr.mxu0 0.0
    %144 = vmatpush1.msra.mxu0 0.0
    %145 = vmatprep.subr.mxu0 0.0
    %146 = vmatpush1.msra.mxu0 0.0
    %147 = vmatprep.subr.mxu0 0.0
    %148 = vmatpush1.msra.mxu0 0.0
    %149 = vmatprep.subr.mxu0 0.0
    %150 = vmatpush1.msra.mxu0 0.0
    %151 = vmatprep.subr.mxu0 0.0
    %152 = vmatpush1.msra.mxu0 0.0
    %153 = vmatprep.subr.mxu0 0.0
    %154 = vmatpush1.msra.mxu0 0.0
    %155 = vmatprep.subr.mxu0 0.0
    %156 = vmatpush1.msra.mxu0 0.0
    %157 = vmatprep.subr.mxu0 0.0
    %158 = vmatpush1.msra.mxu0 0.0
    %159 = vmatprep.subr.mxu0 0.0
    %160 = vmatpush1.msra.mxu0 0.0
    %161 = vmatprep.subr.mxu0 0.0
    %162 = vmatpush1.msra.mxu0 0.0
    %163 = vmatprep.mubr.f32.mxu0 0.0
    %164 = vmatmul.mubr.f32.gmra.mrb[0].mxu0 %v94
    %v165 = vpop.f32.mrb[0].mxu0
    %v166 = vadd.f32 %v90, %v165
    %v167 = vpop.f32.mrb[0].mxu0
    %168 = vmatprep.mubr.f32.mxu0 0.0
    %169 = vmatmul.mubr.f32.gmra.mrb[0].mxu0 %v97
    %v170 = vpop.f32.mrb[0].mxu0
    %v171 = vadd.f32 %v90, %v170
    %v172 = vpop.f32.mrb[0].mxu0
    %173 = vdwg.mxu0
    %v174 = vmax.f32 %v166, 0.0
    %v175 = vmax.f32 %v171, 0.0
    %v176 = vld [vmem:[#allocation6] sm:$0xff]
    %v177 = vld [vmem:[#allocation6 + $0x8] sm:$0xff]
    %v178 = vld [vmem:[#allocation6 + $0x10] sm:$0xff]
    %v179 = vld [vmem:[#allocation6 + $0x18] sm:$0xff]
    %v180 = vld [vmem:[#allocation6 + $0x20] sm:$0xff]
    %v181 = vld [vmem:[#allocation6 + $0x28] sm:$0xff]
    %v182 = vld [vmem:[#allocation6 + $0x30] sm:$0xff]
    %v183 = vld [vmem:[#allocation6 + $0x38] sm:$0xff]
    %v184 = vld [vmem:[#allocation6 + $0x40] sm:$0xff]
    %v185 = vld [vmem:[#allocation6 + $0x48] sm:$0xff]
    %v186 = vld [vmem:[#allocation6 + $0x50] sm:$0xff]
    %v187 = vld [vmem:[#allocation6 + $0x58] sm:$0xff]
    %v188 = vld [vmem:[#allocation6 + $0x60] sm:$0xff]
    %v189 = vld [vmem:[#allocation6 + $0x68] sm:$0xff]
    %v190 = vld [vmem:[#allocation6 + $0x70] sm:$0xff]
    %v191 = vld [vmem:[#allocation6 + $0x78] sm:$0xff]
    %v192 = vld [vmem:[%s4] sm:$0x1]
    %v194 = vlaneseq
    %v195 = vshrl.u32 %v194, 7
    %v196 = vsub.s32 0, %v195
    %v197 = vrot.slane %v192, %v196
    %199 = vmatprep.subr.mxu0 0.0
    %200 = vmatpush1.msra.mxu0 %v176
    %201 = vmatprep.subr.mxu0 0.0
    %202 = vmatpush1.msra.mxu0 %v177
    %203 = vmatprep.subr.mxu0 0.0
    %204 = vmatpush1.msra.mxu0 %v178
    %205 = vmatprep.subr.mxu0 0.0
    %206 = vmatpush1.msra.mxu0 %v179
    %207 = vmatprep.subr.mxu0 0.0
    %208 = vmatpush1.msra.mxu0 %v180
    %209 = vmatprep.subr.mxu0 0.0
    %210 = vmatpush1.msra.mxu0 %v181
    %211 = vmatprep.subr.mxu0 0.0
    %212 = vmatpush1.msra.mxu0 %v182
    %213 = vmatprep.subr.mxu0 0.0
    %214 = vmatpush1.msra.mxu0 %v183
    %215 = vmatprep.subr.mxu0 0.0
    %216 = vmatpush1.msra.mxu0 %v184
    %217 = vmatprep.subr.mxu0 0.0
    %218 = vmatpush1.msra.mxu0 %v185
    %219 = vmatprep.subr.mxu0 0.0
    %220 = vmatpush1.msra.mxu0 %v186
    %221 = vmatprep.subr.mxu0 0.0
    %222 = vmatpush1.msra.mxu0 %v187
    %223 = vmatprep.subr.mxu0 0.0
    %224 = vmatpush1.msra.mxu0 %v188
    %225 = vmatprep.subr.mxu0 0.0
    %226 = vmatpush1.msra.mxu0 %v189
    %227 = vmatprep.subr.mxu0 0.0
    %228 = vmatpush1.msra.mxu0 %v190
    %229 = vmatprep.subr.mxu0 0.0
    %230 = vmatpush1.msra.mxu0 %v191
    %231 = vmatprep.subr.mxu0 0.0
    %232 = vmatpush1.msra.mxu0 0.0
    %233 = vmatprep.subr.mxu0 0.0
    %234 = vmatpush1.msra.mxu0 0.0
    %235 = vmatprep.subr.mxu0 0.0
    %236 = vmatpush1.msra.mxu0 0.0
    %237 = vmatprep.subr.mxu0 0.0
    %238 = vmatpush1.msra.mxu0 0.0
    %239 = vmatprep.subr.mxu0 0.0
    %240 = vmatpush1.msra.mxu0 0.0
    %241 = vmatprep.subr.mxu0 0.0
    %242 = vmatpush1.msra.mxu0 0.0
    %243 = vmatprep.subr.mxu0 0.0
    %244 = vmatpush1.msra.mxu0 0.0
    %245 = vmatprep.subr.mxu0 0.0
    %246 = vmatpush1.msra.mxu0 0.0
    %247 = vmatprep.subr.mxu0 0.0
    %248 = vmatpush1.msra.mxu0 0.0
    %249 = vmatprep.subr.mxu0 0.0
    %250 = vmatpush1.msra.mxu0 0.0
    %251 = vmatprep.subr.mxu0 0.0
    %252 = vmatpush1.msra.mxu0 0.0
    %253 = vmatprep.subr.mxu0 0.0
    %254 = vmatpush1.msra.mxu0 0.0
    %255 = vmatprep.subr.mxu0 0.0
    %256 = vmatpush1.msra.mxu0 0.0
    %257 = vmatprep.subr.mxu0 0.0
    %258 = vmatpush1.msra.mxu0 0.0
    %259 = vmatprep.subr.mxu0 0.0
    %260 = vmatpush1.msra.mxu0 0.0
    %261 = vmatprep.subr.mxu0 0.0
    %262 = vmatpush1.msra.mxu0 0.0
    %263 = vmatprep.mubr.f32.mxu0 0.0
    %264 = vmatmul.mubr.f32.gmra.mrb[0].mxu0 %v174
    %v265 = vpop.f32.mrb[0].mxu0
    %v266 = vadd.f32 %v197, %v265
    %v267 = vpop.f32.mrb[0].mxu0
    %268 = vmatprep.mubr.f32.mxu0 0.0
    %269 = vmatmul.mubr.f32.gmra.mrb[0].mxu0 %v175
    %v270 = vpop.f32.mrb[0].mxu0
    %v271 = vadd.f32 %v197, %v270
    %v272 = vpop.f32.mrb[0].mxu0
    %273 = vdwg.mxu0
    %v274 = vmax.f32 %v266, 0.0
    %v275 = vmax.f32 %v271, 0.0
    %v276 = vld [vmem:[#allocation7] sm:$0xff]
    %v277 = vld [vmem:[#allocation7 + $0x8] sm:$0xff]
    %v278 = vld [vmem:[#allocation7 + $0x10] sm:$0xff]
    %v279 = vld [vmem:[#allocation7 + $0x18] sm:$0xff]
    %v280 = vld [vmem:[#allocation7 + $0x20] sm:$0xff]
    %v281 = vld [vmem:[#allocation7 + $0x28] sm:$0xff]
    %v282 = vld [vmem:[#allocation7 + $0x30] sm:$0xff]
    %v283 = vld [vmem:[#allocation7 + $0x38] sm:$0xff]
    %v284 = vld [vmem:[#allocation7 + $0x40] sm:$0xff]
    %v285 = vld [vmem:[#allocation7 + $0x48] sm:$0xff]
    %v286 = vld [vmem:[#allocation7 + $0x50] sm:$0xff]
    %v287 = vld [vmem:[#allocation7 + $0x58] sm:$0xff]
    %v288 = vld [vmem:[#allocation7 + $0x60] sm:$0xff]
    %v289 = vld [vmem:[#allocation7 + $0x68] sm:$0xff]
    %v290 = vld [vmem:[#allocation7 + $0x70] sm:$0xff]
    %v291 = vld [vmem:[#allocation7 + $0x78] sm:$0xff]
    %v292 = vld [vmem:[%s6] sm:$0x1]
    %v294 = vlaneseq
    %v295 = vshrl.u32 %v294, 7
    %v296 = vsub.s32 0, %v295
    %v297 = vrot.slane %v292, %v296
    %299 = vmatprep.subr.mxu0 0.0
    %300 = vmatpush1.msra.mxu0 %v276
    %301 = vmatprep.subr.mxu0 0.0
    %302 = vmatpush1.msra.mxu0 %v277
    %303 = vmatprep.subr.mxu0 0.0
    %304 = vmatpush1.msra.mxu0 %v278
    %305 = vmatprep.subr.mxu0 0.0
    %306 = vmatpush1.msra.mxu0 %v279
    %307 = vmatprep.subr.mxu0 0.0
    %308 = vmatpush1.msra.mxu0 %v280
    %309 = vmatprep.subr.mxu0 0.0
    %310 = vmatpush1.msra.mxu0 %v281
    %311 = vmatprep.subr.mxu0 0.0
    %312 = vmatpush1.msra.mxu0 %v282
    %313 = vmatprep.subr.mxu0 0.0
    %314 = vmatpush1.msra.mxu0 %v283
    %315 = vmatprep.subr.mxu0 0.0
    %316 = vmatpush1.msra.mxu0 %v284
    %317 = vmatprep.subr.mxu0 0.0
    %318 = vmatpush1.msra.mxu0 %v285
    %319 = vmatprep.subr.mxu0 0.0
    %320 = vmatpush1.msra.mxu0 %v286
    %321 = vmatprep.subr.mxu0 0.0
    %322 = vmatpush1.msra.mxu0 %v287
    %323 = vmatprep.subr.mxu0 0.0
    %324 = vmatpush1.msra.mxu0 %v288
    %325 = vmatprep.subr.mxu0 0.0
    %326 = vmatpush1.msra.mxu0 %v289
    %327 = vmatprep.subr.mxu0 0.0
    %328 = vmatpush1.msra.mxu0 %v290
    %329 = vmatprep.subr.mxu0 0.0
    %330 = vmatpush1.msra.mxu0 %v291
    %331 = vmatprep.subr.mxu0 0.0
    %332 = vmatpush1.msra.mxu0 0.0
    %333 = vmatprep.subr.mxu0 0.0
    %334 = vmatpush1.msra.mxu0 0.0
    %335 = vmatprep.subr.mxu0 0.0
    %336 = vmatpush1.msra.mxu0 0.0
    %337 = vmatprep.subr.mxu0 0.0
    %338 = vmatpush1.msra.mxu0 0.0
    %339 = vmatprep.subr.mxu0 0.0
    %340 = vmatpush1.msra.mxu0 0.0
    %341 = vmatprep.subr.mxu0 0.0
    %342 = vmatpush1.msra.mxu0 0.0
    %343 = vmatprep.subr.mxu0 0.0
    %344 = vmatpush1.msra.mxu0 0.0
    %345 = vmatprep.subr.mxu0 0.0
    %346 = vmatpush1.msra.mxu0 0.0
    %347 = vmatprep.subr.mxu0 0.0
    %348 = vmatpush1.msra.mxu0 0.0
    %349 = vmatprep.subr.mxu0 0.0
    %350 = vmatpush1.msra.mxu0 0.0
    %351 = vmatprep.subr.mxu0 0.0
    %352 = vmatpush1.msra.mxu0 0.0
    %353 = vmatprep.subr.mxu0 0.0
    %354 = vmatpush1.msra.mxu0 0.0
    %355 = vmatprep.subr.mxu0 0.0
    %356 = vmatpush1.msra.mxu0 0.0
    %357 = vmatprep.subr.mxu0 0.0
    %358 = vmatpush1.msra.mxu0 0.0
    %359 = vmatprep.subr.mxu0 0.0
    %360 = vmatpush1.msra.mxu0 0.0
    %361 = vmatprep.subr.mxu0 0.0
    %362 = vmatpush1.msra.mxu0 0.0
    %363 = vmatprep.mubr.f32.mxu0 0.0
    %364 = vmatmul.mubr.f32.gmra.mrb[0].mxu0 %v274
    %v365 = vpop.f32.mrb[0].mxu0
    %v366 = vadd.f32 %v297, %v365
    %v367 = vpop.f32.mrb[0].mxu0
    %368 = vmatprep.mubr.f32.mxu0 0.0
    %369 = vmatmul.mubr.f32.gmra.mrb[0].mxu0 %v275
    %v370 = vpop.f32.mrb[0].mxu0
    %v371 = vadd.f32 %v297, %v370
    %v372 = vpop.f32.mrb[0].mxu0
    %373 = vdwg.mxu0
    %374 = vst [vmem:[%s7] sm:$0xff] %v366
    %375 = vst [vmem:[%s7 + $0x8] sm:$0xff] %v371
    // Predicated region
    $region46: #{two_layer_fc_forward.1} parent=1 // pred_check
      _
    $region47: #{two_layer_fc_forward.1} parent=1 // pred_check_branch
      %377 = sbr.rel (0) target = $region49
    $region48: #{two_layer_fc_forward.1} parent=1 // pred_region
      _
    $region49: #{two_layer_fc_forward.1} parent=1 // pred_fallthru
      _
    // Predicated region
    $region50: #{two_layer_fc_forward.1} parent=1 // pred_check
      _
    $region51: #{two_layer_fc_forward.1} parent=1 // pred_check_branch
      %379 = sbr.rel (0) target = $region53
    $region52: #{two_layer_fc_forward.1} parent=1 // pred_region
      _
    $region53: #{two_layer_fc_forward.1} parent=1 // pred_fallthru
      _
    %380 = vsyncpa [#allocation3], 1
    %381 = vsyncpa [#allocation5], 1
    %382 = vsyncpa [#allocation8], 1

// kernel: two_layer_fc_forward.1
$region0: #{two_layer_fc_forward.1}
  #allocation0 [shape = 'u32[]', space=smem, size = 0x4, offset = 0x4, fixed_abs, tag = 'smem constant byte address 0x4 - core index']
  #allocation1 [shape = 'u32[144,128]{1,0:T(1,128)}', space=vmem, size = 0x12000, scoped, tag = 'internal scratch']
  %s0 = inlined_call_operand.hbm [shape: f32[16,16], index: 0, kind: input, shape index: {}]
  %s1 = inlined_call_operand.hbm [shape: f32[16,128], index: 1, kind: input, shape index: {}]
  %s2 = inlined_call_operand.vmem [shape: f32[1,128], index: 2, kind: input, shape index: {}]
  %s3 = inlined_call_operand.hbm [shape: f32[128,128], index: 3, kind: input, shape index: {}]
  %s4 = inlined_call_operand.vmem [shape: f32[1,128], index: 4, kind: input, shape index: {}]
  %s5 = inlined_call_operand.hbm [shape: f32[128,128], index: 5, kind: input, shape index: {}]
  %s6 = inlined_call_operand.vmem [shape: f32[1,128], index: 6, kind: input, shape index: {}]
  %s7 = inlined_call_operand.vmem [shape: f32[16,128], index: 7, kind: output, shape index: {}]
  %s8 = sld [smem:[#allocation0]]
  $region54: #{two_layer_fc_forward.1} parent=0
    _
  %s10 = ssub.s32 1, %s8
  %s11 = scalar_select 0, %s10, %s8
  $region1: #{two_layer_fc_forward.1} parent=0
    #allocation2 [shape = 'u8[8192]{0}', space=vmem, size = 0x2000, scoped, tag = 'input window, operand 0, single buffered']
    #allocation3 [shape = 's32[1]{0}', space=sflag, size = 0x4, scoped, tag = 'scoped memory for two_layer_fc_forward.1']
    #allocation4 [shape = 'u8[8192]{0}', space=vmem, size = 0x2000, scoped, tag = 'input window, operand 1, single buffered']
    #allocation5 [shape = 's32[1]{0}', space=sflag, size = 0x4, scoped, tag = 'scoped memory for two_layer_fc_forward.1']
    #allocation6 [shape = 'u8[65536]{0}', space=vmem, size = 0x10000, scoped, tag = 'input window, operand 3, single buffered']
    #allocation7 [shape = 'u8[65536]{0}', space=vmem, size = 0x10000, scoped, tag = 'input window, operand 5, single buffered']
    #allocation8 [shape = 's32[1]{0}', space=sflag, size = 0x4, scoped, tag = 'scoped memory for two_layer_fc_forward.1']
    %12 = vsyncpa [#allocation3], 0
    %13 = vsyncpa [#allocation5], 0
    %14 = vsyncpa [#allocation8], 0
    // Predicated region
    $region2: #{two_layer_fc_forward.1} parent=1 // pred_check
      _
    $region3: #{two_layer_fc_forward.1} parent=1 // pred_check_branch
      %16 = sbr.rel (0) target = $region5
    $region4: #{two_layer_fc_forward.1} parent=1 // pred_region
      %s18 = ssub.s32 256, 256
      %19 = vsyncadd [#allocation3], %s18
      %s20 = sshll.u32 [#allocation2], 4
      %s21 = int_to_ptr.vmem [resolvable:$true] %s20
      %26 = dma.hbm_to_vmem [thread:$0]  %s0, 256, %s21, [#allocation3], 128, 128, 8
    $region5: #{two_layer_fc_forward.1} parent=1 // pred_fallthru
      _
    // Predicated region
    $region6: #{two_layer_fc_forward.1} parent=1 // pred_check
      _
    $region7: #{two_layer_fc_forward.1} parent=1 // pred_check_branch
      %28 = sbr.rel (0) target = $region9
    $region8: #{two_layer_fc_forward.1} parent=1 // pred_region
      %s30 = ssub.s32 256, 256
      %31 = vsyncadd [#allocation5], %s30
      %s32 = sshll.u32 [#allocation4], 4
      %s33 = int_to_ptr.vmem [resolvable:$true] %s32
      %38 = dma.hbm_to_vmem [thread:$0]  %s1, 256, %s33, [#allocation5], 128, 128, 8
    $region9: #{two_layer_fc_forward.1} parent=1 // pred_fallthru
      _
    // Predicated region
    $region10: #{two_layer_fc_forward.1} parent=1 // pred_check
      _
    $region11: #{two_layer_fc_forward.1} parent=1 // pred_check_branch
      %40 = sbr.rel (0) target = $region13
    $region12: #{two_layer_fc_forward.1} parent=1 // pred_region
      _
    $region13: #{two_layer_fc_forward.1} parent=1 // pred_fallthru
      _
    // Predicated region
    $region14: #{two_layer_fc_forward.1} parent=1 // pred_check
      _
    $region15: #{two_layer_fc_forward.1} parent=1 // pred_check_branch
      %42 = sbr.rel (0) target = $region17
    $region16: #{two_layer_fc_forward.1} parent=1 // pred_region
      %s44 = ssub.s32 2048, 2048
      %45 = vsyncadd [#allocation5], %s44
      %s46 = sshll.u32 [#allocation6], 4
      %s47 = int_to_ptr.vmem [resolvable:$true] %s46
      %52 = dma.hbm_to_vmem [thread:$0]  %s3, 2048, %s47, [#allocation5], 128, 128, 8
    $region17: #{two_layer_fc_forward.1} parent=1 // pred_fallthru
      _
    // Predicated region
    $region18: #{two_layer_fc_forward.1} parent=1 // pred_check
      _
    $region19: #{two_layer_fc_forward.1} parent=1 // pred_check_branch
      %54 = sbr.rel (0) target = $region21
    $region20: #{two_layer_fc_forward.1} parent=1 // pred_region
      _
    $region21: #{two_layer_fc_forward.1} parent=1 // pred_fallthru
      _
    // Predicated region
    $region22: #{two_layer_fc_forward.1} parent=1 // pred_check
      _
    $region23: #{two_layer_fc_forward.1} parent=1 // pred_check_branch
      %56 = sbr.rel (0) target = $region25
    $region24: #{two_layer_fc_forward.1} parent=1 // pred_region
      %s58 = ssub.s32 2048, 2048
      %59 = vsyncadd [#allocation8], %s58
      %s60 = sshll.u32 [#allocation7], 4
      %s61 = int_to_ptr.vmem [resolvable:$true] %s60
      %66 = dma.hbm_to_vmem [thread:$0]  %s5, 2048, %s61, [#allocation8], 128, 128, 8
    $region25: #{two_layer_fc_forward.1} parent=1 // pred_fallthru
      _
    // Predicated region
    $region26: #{two_layer_fc_forward.1} parent=1 // pred_check
      _
    $region27: #{two_layer_fc_forward.1} parent=1 // pred_check_branch
      %68 = sbr.rel (0) target = $region29
    $region28: #{two_layer_fc_forward.1} parent=1 // pred_region
      _
    $region29: #{two_layer_fc_forward.1} parent=1 // pred_fallthru
      _
    // Predicated region
    $region30: #{two_layer_fc_forward.1} parent=1 // pred_check
      _
    $region31: #{two_layer_fc_forward.1} parent=1 // pred_check_branch
      %70 = sbr.rel (0) target = $region33
    $region32: #{two_layer_fc_forward.1} parent=1 // pred_region
      %71 = dma.done [#allocation3], 256
    $region33: #{two_layer_fc_forward.1} parent=1 // pred_fallthru
      _
    // Predicated region
    $region34: #{two_layer_fc_forward.1} parent=1 // pred_check
      _
    $region35: #{two_layer_fc_forward.1} parent=1 // pred_check_branch
      %73 = sbr.rel (0) target = $region37
    $region36: #{two_layer_fc_forward.1} parent=1 // pred_region
      %74 = dma.done [#allocation5], 256
    $region37: #{two_layer_fc_forward.1} parent=1 // pred_fallthru
      _
    // Predicated region
    $region38: #{two_layer_fc_forward.1} parent=1 // pred_check
      _
    $region39: #{two_layer_fc_forward.1} parent=1 // pred_check_branch
      %76 = sbr.rel (0) target = $region41
    $region40: #{two_layer_fc_forward.1} parent=1 // pred_region
      %77 = dma.done [#allocation5], 2048
    $region41: #{two_layer_fc_forward.1} parent=1 // pred_fallthru
      _
    // Predicated region
    $region42: #{two_layer_fc_forward.1} parent=1 // pred_check
      _
    $region43: #{two_layer_fc_forward.1} parent=1 // pred_check_branch
      %79 = sbr.rel (0) target = $region45
    $region44: #{two_layer_fc_forward.1} parent=1 // pred_region
      %80 = dma.done [#allocation8], 2048
    $region45: #{two_layer_fc_forward.1} parent=1 // pred_fallthru
      _
    %v81 = vld [vmem:[#allocation2] sm:$0xff]
    %v82 = vld [vmem:[#allocation2 + $0x8] sm:$0xff]
    %v83 = vld [vmem:[#allocation4] sm:$0xff]
    %v84 = vld [vmem:[#allocation4 + $0x8] sm:$0xff]
    %v85 = vld [vmem:[%s2] sm:$0x1]
    %v87 = vlaneseq
    %v88 = vshrl.u32 %v87, 7
    %v89 = vsub.s32 0, %v88
    %v90 = vrot.slane %v85, %v89
    %vm92 = vcmask 130048
    %v94 = vsel %vm92, %v81, 0
    %v97 = vsel %vm92, %v82, 0
    %99 = vmatprep.subr.mxu0 0.0
    %100 = vmatpush1.msra.mxu0 %v83
    %101 = vmatprep.subr.mxu0 0.0
    %102 = vmatpush1.msra.mxu0 %v84
    %103 = vmatprep.subr.mxu0 0.0
    %104 = vmatpush1.msra.mxu0 0.0
    %105 = vmatprep.subr.mxu0 0.0
    %106 = vmatpush1.msra.mxu0 0.0
    %107 = vmatprep.subr.mxu0 0.0
    %108 = vmatpush1.msra.mxu0 0.0
    %109 = vmatprep.subr.mxu0 0.0
    %110 = vmatpush1.msra.mxu0 0.0
    %111 = vmatprep.subr.mxu0 0.0
    %112 = vmatpush1.msra.mxu0 0.0
    %113 = vmatprep.subr.mxu0 0.0
    %114 = vmatpush1.msra.mxu0 0.0
    %115 = vmatprep.subr.mxu0 0.0
    %116 = vmatpush1.msra.mxu0 0.0
    %117 = vmatprep.subr.mxu0 0.0
    %118 = vmatpush1.msra.mxu0 0.0
    %119 = vmatprep.subr.mxu0 0.0
    %120 = vmatpush1.msra.mxu0 0.0
    %121 = vmatprep.subr.mxu0 0.0
    %122 = vmatpush1.msra.mxu0 0.0
    %123 = vmatprep.subr.mxu0 0.0
    %124 = vmatpush1.msra.mxu0 0.0
    %125 = vmatprep.subr.mxu0 0.0
    %126 = vmatpush1.msra.mxu0 0.0
    %127 = vmatprep.subr.mxu0 0.0
    %128 = vmatpush1.msra.mxu0 0.0
    %129 = vmatprep.subr.mxu0 0.0
    %130 = vmatpush1.msra.mxu0 0.0
    %131 = vmatprep.subr.mxu0 0.0
    %132 = vmatpush1.msra.mxu0 0.0
    %133 = vmatprep.subr.mxu0 0.0
    %134 = vmatpush1.msra.mxu0 0.0
    %135 = vmatprep.subr.mxu0 0.0
    %136 = vmatpush1.msra.mxu0 0.0
    %137 = vmatprep.subr.mxu0 0.0
    %138 = vmatpush1.msra.mxu0 0.0
    %139 = vmatprep.subr.mxu0 0.0
    %140 = vmatpush1.msra.mxu0 0.0
    %141 = vmatprep.subr.mxu0 0.0
    %142 = vmatpush1.msra.mxu0 0.0
    %143 = vmatprep.subr.mxu0 0.0
    %144 = vmatpush1.msra.mxu0 0.0
    %145 = vmatprep.subr.mxu0 0.0
    %146 = vmatpush1.msra.mxu0 0.0
    %147 = vmatprep.subr.mxu0 0.0
    %148 = vmatpush1.msra.mxu0 0.0
    %149 = vmatprep.subr.mxu0 0.0
    %150 = vmatpush1.msra.mxu0 0.0
    %151 = vmatprep.subr.mxu0 0.0
    %152 = vmatpush1.msra.mxu0 0.0
    %153 = vmatprep.subr.mxu0 0.0
    %154 = vmatpush1.msra.mxu0 0.0
    %155 = vmatprep.subr.mxu0 0.0
    %156 = vmatpush1.msra.mxu0 0.0
    %157 = vmatprep.subr.mxu0 0.0
    %158 = vmatpush1.msra.mxu0 0.0
    %159 = vmatprep.subr.mxu0 0.0
    %160 = vmatpush1.msra.mxu0 0.0
    %161 = vmatprep.subr.mxu0 0.0
    %162 = vmatpush1.msra.mxu0 0.0
    %163 = vmatprep.mubr.f32.mxu0 0.0
    %164 = vmatmul.mubr.f32.gmra.mrb[0].mxu0 %v94
    %v165 = vpop.f32.mrb[0].mxu0
    %v166 = vadd.f32 %v90, %v165
    %v167 = vpop.f32.mrb[0].mxu0
    %168 = vmatprep.mubr.f32.mxu0 0.0
    %169 = vmatmul.mubr.f32.gmra.mrb[0].mxu0 %v97
    %v170 = vpop.f32.mrb[0].mxu0
    %v171 = vadd.f32 %v90, %v170
    %v172 = vpop.f32.mrb[0].mxu0
    %173 = vdwg.mxu0
    %v174 = vmax.f32 %v166, 0.0
    %v175 = vmax.f32 %v171, 0.0
    %v176 = vld [vmem:[#allocation6] sm:$0xff]
    %v177 = vld [vmem:[#allocation6 + $0x8] sm:$0xff]
    %v178 = vld [vmem:[#allocation6 + $0x10] sm:$0xff]
    %v179 = vld [vmem:[#allocation6 + $0x18] sm:$0xff]
    %v180 = vld [vmem:[#allocation6 + $0x20] sm:$0xff]
    %v181 = vld [vmem:[#allocation6 + $0x28] sm:$0xff]
    %v182 = vld [vmem:[#allocation6 + $0x30] sm:$0xff]
    %v183 = vld [vmem:[#allocation6 + $0x38] sm:$0xff]
    %v184 = vld [vmem:[#allocation6 + $0x40] sm:$0xff]
    %v185 = vld [vmem:[#allocation6 + $0x48] sm:$0xff]
    %v186 = vld [vmem:[#allocation6 + $0x50] sm:$0xff]
    %v187 = vld [vmem:[#allocation6 + $0x58] sm:$0xff]
    %v188 = vld [vmem:[#allocation6 + $0x60] sm:$0xff]
    %v189 = vld [vmem:[#allocation6 + $0x68] sm:$0xff]
    %v190 = vld [vmem:[#allocation6 + $0x70] sm:$0xff]
    %v191 = vld [vmem:[#allocation6 + $0x78] sm:$0xff]
    %v192 = vld [vmem:[%s4] sm:$0x1]
    %v194 = vlaneseq
    %v195 = vshrl.u32 %v194, 7
    %v196 = vsub.s32 0, %v195
    %v197 = vrot.slane %v192, %v196
    %199 = vmatprep.subr.mxu0 0.0
    %200 = vmatpush1.msra.mxu0 %v176
    %201 = vmatprep.subr.mxu0 0.0
    %202 = vmatpush1.msra.mxu0 %v177
    %203 = vmatprep.subr.mxu0 0.0
    %204 = vmatpush1.msra.mxu0 %v178
    %205 = vmatprep.subr.mxu0 0.0
    %206 = vmatpush1.msra.mxu0 %v179
    %207 = vmatprep.subr.mxu0 0.0
    %208 = vmatpush1.msra.mxu0 %v180
    %209 = vmatprep.subr.mxu0 0.0
    %210 = vmatpush1.msra.mxu0 %v181
    %211 = vmatprep.subr.mxu0 0.0
    %212 = vmatpush1.msra.mxu0 %v182
    %213 = vmatprep.subr.mxu0 0.0
    %214 = vmatpush1.msra.mxu0 %v183
    %215 = vmatprep.subr.mxu0 0.0
    %216 = vmatpush1.msra.mxu0 %v184
    %217 = vmatprep.subr.mxu0 0.0
    %218 = vmatpush1.msra.mxu0 %v185
    %219 = vmatprep.subr.mxu0 0.0
    %220 = vmatpush1.msra.mxu0 %v186
    %221 = vmatprep.subr.mxu0 0.0
    %222 = vmatpush1.msra.mxu0 %v187
    %223 = vmatprep.subr.mxu0 0.0
    %224 = vmatpush1.msra.mxu0 %v188
    %225 = vmatprep.subr.mxu0 0.0
    %226 = vmatpush1.msra.mxu0 %v189
    %227 = vmatprep.subr.mxu0 0.0
    %228 = vmatpush1.msra.mxu0 %v190
    %229 = vmatprep.subr.mxu0 0.0
    %230 = vmatpush1.msra.mxu0 %v191
    %231 = vmatprep.subr.mxu0 0.0
    %232 = vmatpush1.msra.mxu0 0.0
    %233 = vmatprep.subr.mxu0 0.0
    %234 = vmatpush1.msra.mxu0 0.0
    %235 = vmatprep.subr.mxu0 0.0
    %236 = vmatpush1.msra.mxu0 0.0
    %237 = vmatprep.subr.mxu0 0.0
    %238 = vmatpush1.msra.mxu0 0.0
    %239 = vmatprep.subr.mxu0 0.0
    %240 = vmatpush1.msra.mxu0 0.0
    %241 = vmatprep.subr.mxu0 0.0
    %242 = vmatpush1.msra.mxu0 0.0
    %243 = vmatprep.subr.mxu0 0.0
    %244 = vmatpush1.msra.mxu0 0.0
    %245 = vmatprep.subr.mxu0 0.0
    %246 = vmatpush1.msra.mxu0 0.0
    %247 = vmatprep.subr.mxu0 0.0
    %248 = vmatpush1.msra.mxu0 0.0
    %249 = vmatprep.subr.mxu0 0.0
    %250 = vmatpush1.msra.mxu0 0.0
    %251 = vmatprep.subr.mxu0 0.0
    %252 = vmatpush1.msra.mxu0 0.0
    %253 = vmatprep.subr.mxu0 0.0
    %254 = vmatpush1.msra.mxu0 0.0
    %255 = vmatprep.subr.mxu0 0.0
    %256 = vmatpush1.msra.mxu0 0.0
    %257 = vmatprep.subr.mxu0 0.0
    %258 = vmatpush1.msra.mxu0 0.0
    %259 = vmatprep.subr.mxu0 0.0
    %260 = vmatpush1.msra.mxu0 0.0
    %261 = vmatprep.subr.mxu0 0.0
    %262 = vmatpush1.msra.mxu0 0.0
    %263 = vmatprep.mubr.f32.mxu0 0.0
    %264 = vmatmul.mubr.f32.gmra.mrb[0].mxu0 %v174
    %v265 = vpop.f32.mrb[0].mxu0
    %v266 = vadd.f32 %v197, %v265
    %v267 = vpop.f32.mrb[0].mxu0
    %268 = vmatprep.mubr.f32.mxu0 0.0
    %269 = vmatmul.mubr.f32.gmra.mrb[0].mxu0 %v175
    %v270 = vpop.f32.mrb[0].mxu0
    %v271 = vadd.f32 %v197, %v270
    %v272 = vpop.f32.mrb[0].mxu0
    %273 = vdwg.mxu0
    %v274 = vmax.f32 %v266, 0.0
    %v275 = vmax.f32 %v271, 0.0
    %v276 = vld [vmem:[#allocation7] sm:$0xff]
    %v277 = vld [vmem:[#allocation7 + $0x8] sm:$0xff]
    %v278 = vld [vmem:[#allocation7 + $0x10] sm:$0xff]
    %v279 = vld [vmem:[#allocation7 + $0x18] sm:$0xff]
    %v280 = vld [vmem:[#allocation7 + $0x20] sm:$0xff]
    %v281 = vld [vmem:[#allocation7 + $0x28] sm:$0xff]
    %v282 = vld [vmem:[#allocation7 + $0x30] sm:$0xff]
    %v283 = vld [vmem:[#allocation7 + $0x38] sm:$0xff]
    %v284 = vld [vmem:[#allocation7 + $0x40] sm:$0xff]
    %v285 = vld [vmem:[#allocation7 + $0x48] sm:$0xff]
    %v286 = vld [vmem:[#allocation7 + $0x50] sm:$0xff]
    %v287 = vld [vmem:[#allocation7 + $0x58] sm:$0xff]
    %v288 = vld [vmem:[#allocation7 + $0x60] sm:$0xff]
    %v289 = vld [vmem:[#allocation7 + $0x68] sm:$0xff]
    %v290 = vld [vmem:[#allocation7 + $0x70] sm:$0xff]
    %v291 = vld [vmem:[#allocation7 + $0x78] sm:$0xff]
    %v292 = vld [vmem:[%s6] sm:$0x1]
    %v294 = vlaneseq
    %v295 = vshrl.u32 %v294, 7
    %v296 = vsub.s32 0, %v295
    %v297 = vrot.slane %v292, %v296
    %299 = vmatprep.subr.mxu0 0.0
    %300 = vmatpush1.msra.mxu0 %v276
    %301 = vmatprep.subr.mxu0 0.0
    %302 = vmatpush1.msra.mxu0 %v277
    %303 = vmatprep.subr.mxu0 0.0
    %304 = vmatpush1.msra.mxu0 %v278
    %305 = vmatprep.subr.mxu0 0.0
    %306 = vmatpush1.msra.mxu0 %v279
    %307 = vmatprep.subr.mxu0 0.0
    %308 = vmatpush1.msra.mxu0 %v280
    %309 = vmatprep.subr.mxu0 0.0
    %310 = vmatpush1.msra.mxu0 %v281
    %311 = vmatprep.subr.mxu0 0.0
    %312 = vmatpush1.msra.mxu0 %v282
    %313 = vmatprep.subr.mxu0 0.0
    %314 = vmatpush1.msra.mxu0 %v283
    %315 = vmatprep.subr.mxu0 0.0
    %316 = vmatpush1.msra.mxu0 %v284
    %317 = vmatprep.subr.mxu0 0.0
    %318 = vmatpush1.msra.mxu0 %v285
    %319 = vmatprep.subr.mxu0 0.0
    %320 = vmatpush1.msra.mxu0 %v286
    %321 = vmatprep.subr.mxu0 0.0
    %322 = vmatpush1.msra.mxu0 %v287
    %323 = vmatprep.subr.mxu0 0.0
    %324 = vmatpush1.msra.mxu0 %v288
    %325 = vmatprep.subr.mxu0 0.0
    %326 = vmatpush1.msra.mxu0 %v289
    %327 = vmatprep.subr.mxu0 0.0
    %328 = vmatpush1.msra.mxu0 %v290
    %329 = vmatprep.subr.mxu0 0.0
    %330 = vmatpush1.msra.mxu0 %v291
    %331 = vmatprep.subr.mxu0 0.0
    %332 = vmatpush1.msra.mxu0 0.0
    %333 = vmatprep.subr.mxu0 0.0
    %334 = vmatpush1.msra.mxu0 0.0
    %335 = vmatprep.subr.mxu0 0.0
    %336 = vmatpush1.msra.mxu0 0.0
    %337 = vmatprep.subr.mxu0 0.0
    %338 = vmatpush1.msra.mxu0 0.0
    %339 = vmatprep.subr.mxu0 0.0
    %340 = vmatpush1.msra.mxu0 0.0
    %341 = vmatprep.subr.mxu0 0.0
    %342 = vmatpush1.msra.mxu0 0.0
    %343 = vmatprep.subr.mxu0 0.0
    %344 = vmatpush1.msra.mxu0 0.0
    %345 = vmatprep.subr.mxu0 0.0
    %346 = vmatpush1.msra.mxu0 0.0
    %347 = vmatprep.subr.mxu0 0.0
    %348 = vmatpush1.msra.mxu0 0.0
    %349 = vmatprep.subr.mxu0 0.0
    %350 = vmatpush1.msra.mxu0 0.0
    %351 = vmatprep.subr.mxu0 0.0
    %352 = vmatpush1.msra.mxu0 0.0
    %353 = vmatprep.subr.mxu0 0.0
    %354 = vmatpush1.msra.mxu0 0.0
    %355 = vmatprep.subr.mxu0 0.0
    %356 = vmatpush1.msra.mxu0 0.0
    %357 = vmatprep.subr.mxu0 0.0
    %358 = vmatpush1.msra.mxu0 0.0
    %359 = vmatprep.subr.mxu0 0.0
    %360 = vmatpush1.msra.mxu0 0.0
    %361 = vmatprep.subr.mxu0 0.0
    %362 = vmatpush1.msra.mxu0 0.0
    %363 = vmatprep.mubr.f32.mxu0 0.0
    %364 = vmatmul.mubr.f32.gmra.mrb[0].mxu0 %v274
    %v365 = vpop.f32.mrb[0].mxu0
    %v366 = vadd.f32 %v297, %v365
    %v367 = vpop.f32.mrb[0].mxu0
    %368 = vmatprep.mubr.f32.mxu0 0.0
    %369 = vmatmul.mubr.f32.gmra.mrb[0].mxu0 %v275
    %v370 = vpop.f32.mrb[0].mxu0
    %v371 = vadd.f32 %v297, %v370
    %v372 = vpop.f32.mrb[0].mxu0
    %373 = vdwg.mxu0
    %374 = vst [vmem:[%s7] sm:$0xff] %v366
    %375 = vst [vmem:[%s7 + $0x8] sm:$0xff] %v371
    // Predicated region
    $region46: #{two_layer_fc_forward.1} parent=1 // pred_check
      _
    $region47: #{two_layer_fc_forward.1} parent=1 // pred_check_branch
      %377 = sbr.rel (0) target = $region49
    $region48: #{two_layer_fc_forward.1} parent=1 // pred_region
      _
    $region49: #{two_layer_fc_forward.1} parent=1 // pred_fallthru
      _
    // Predicated region
    $region50: #{two_layer_fc_forward.1} parent=1 // pred_check
      _
    $region51: #{two_layer_fc_forward.1} parent=1 // pred_check_branch
      %379 = sbr.rel (0) target = $region53
    $region52: #{two_layer_fc_forward.1} parent=1 // pred_region
      _
    $region53: #{two_layer_fc_forward.1} parent=1 // pred_fallthru
      _
    %380 = vsyncpa [#allocation3], 1
    %381 = vsyncpa [#allocation5], 1
    %382 = vsyncpa [#allocation8], 1

</llo_original>
